<compile_context>
chip_gen: v7x
topology: tpu7x:2x2x1
jax: 0.10.0
libtpu: 0.0.40
codegen_flags: <defaults>
</compile_context>

<pallas_src>
import functools

import jax
import jax.numpy as jnp
import numpy as np
from jax.experimental import pallas as pl
from jax.experimental.pallas import tpu as pltpu


# ----------------------------------------------------------------------------
# Config (attributes ENC_CNNTurbo_2D reads from `config`)
# ----------------------------------------------------------------------------
class Config:
    block_len = 16
    enc_num_layer = 2
    # The original module applies nn.Linear(enc_num_unit, 1) to the trailing
    # W=2 axis of the NCHW conv output, so it only type-checks when
    # enc_num_unit == 2; we keep that literal semantics (asserted below).
    enc_num_unit = 2
    enc_kernel_size = 5


def _elu(x):
    # F.elu with alpha=1:  x if x > 0 else exp(x) - 1  (clamped exp is safe)
    return jnp.where(x > 0.0, x, jnp.exp(jnp.minimum(x, 0.0)) - 1.0)


# ----------------------------------------------------------------------------
# Pallas kernel: one grid step == one sequence of the batch
# ----------------------------------------------------------------------------
def _make_encoder_kernel(bs, L, K, U, num_layers):
    pad = K // 2
    assert 0 < pad <= L, "kernel_size must satisfy 0 < K//2 <= block_len"

    def kernel(u_ref, *refs):
        # refs = conv (Wt, b) pairs, head (Mh_t, bh_t), out_ref, acc scratch
        conv_refs = [(refs[2 * l], refs[2 * l + 1]) for l in range(num_layers)]
        mh_t_ref = refs[2 * num_layers]
        bh_t_ref = refs[2 * num_layers + 1]
        out_ref, acc_ref = refs[-2], refs[-1]

        step = pl.program_id(0)

        # ---- input prep: bipolar map (streams already stacked + interleaved
        # host-side).  Layout: (2, L) — w stream on sublanes, block on lanes.
        a = 2.0 * u_ref[0].astype(jnp.float32) - 1.0                  # (2, L)

        # ---- conv stack: circular-pad(H) / zero-pad(W) Conv2d + ELU ----------
        for wt_ref, b_ref in conv_refs:
            am = a.astype(wt_ref.dtype)                                # bf16 in
            # circular extension along the block (lane) axis, then K static
            # shifted slices -> im2col slab R (K*f_in, L).
            # TODO(synk): use pltpu.roll for realistic (>=128-lane) block_len.
            ext = jnp.concatenate([am[:, L - pad:], am, am[:, :pad]], axis=1)
            r = jnp.concatenate([ext[:, i:i + L] for i in range(K)], axis=0)
            y = jnp.dot(wt_ref[...], r,
                        preferred_element_type=jnp.float32) + b_ref[...]
            a = _elu(y)                                                # (2U, L) f32
            # TODO(synk): nn.Dropout(0.1) omitted (inference semantics).

        # ---- head: nn.Linear(enc_num_unit, 1) over the W axis, + ELU ---------
        zt = jnp.dot(mh_t_ref[...], a.astype(mh_t_ref.dtype),
                     preferred_element_type=jnp.float32) + bh_t_ref[...]
        x_tx = _elu(zt)                                                # (U, L)

        # stash un-normalized x_tx in the VMEM-resident accumulation slab
        acc_ref[:, pl.ds(step, 1), :] = x_tx[:, None, :]

        # ---- last step: fused power constraint over the whole batch ----------
        @pl.when(step == pl.num_programs(0) - 1)
        def _():
            x = acc_ref[...]                                           # (U, bs, L)
            n = float(U * bs * L)
            s1 = jnp.sum(x)
            s2 = jnp.sum(x * x)
            mean = s1 / n
            var = (s2 - n * mean * mean) / (n - 1.0)                   # torch.std: ddof=1
            out_ref[...] = (x - mean) * jax.lax.rsqrt(var)

    return kernel


# ----------------------------------------------------------------------------
# Host-side (one-time) parameter / layout preparation
# ----------------------------------------------------------------------------
def _conv_weight_to_matmul_t(w_torch, b_torch, dtype):
    """torch Conv2d weight (C_out, C_in, K, 3), bias (C_out,) ->
       transposed im2col weight Wt (2*C_out, K*2*C_in), bias (2*C_out, 1).
       Wt[wo*C_out+co, i*2*C_in + wi*C_in + ci] = W[co, ci, i, wi - wo + 1]
       (width taps that hit the zero pad of the W axis simply drop out)."""
    w = np.asarray(w_torch, np.float32)
    bt = np.asarray(b_torch, np.float32)
    c_out, c_in, K, kw = w.shape
    assert kw == 3
    blocks = np.zeros((2, c_out, K, 2, c_in), np.float32)   # [wo, co, i, wi, ci]
    for wo in range(2):
        for wi in range(2):
            j = wi - wo + 1                                  # width tap hit by (wi, wo)
            blocks[wo, :, :, wi, :] = np.transpose(w[:, :, :, j], (0, 2, 1))
    wt = blocks.reshape(2 * c_out, K * 2 * c_in)
    bvec = np.tile(bt, 2).reshape(2 * c_out, 1)
    return jnp.asarray(wt, dtype), jnp.asarray(bvec, jnp.float32)


def _linear_to_matmul_t(w_lin, b_lin, U, dtype):
    """torch nn.Linear(2, 1) applied to the W axis -> head matrices:
       Mh_t (U, 2*U) with Mh_t[u, w*U+u'] = W[0, w] * (u' == u), bias (U, 1)."""
    w = np.asarray(w_lin, np.float32)                        # (1, 2)
    b = np.asarray(b_lin, np.float32)                        # (1,)
    eye = np.eye(U, dtype=np.float32)
    mh_t = np.concatenate([w[0, 0] * eye, w[0, 1] * eye], axis=1)   # (U, 2U)
    bh_t = np.full((U, 1), b[0], np.float32)
    return jnp.asarray(mh_t, dtype), jnp.asarray(bh_t, jnp.float32)


# ----------------------------------------------------------------------------
# Forward pass (single jitted dispatch: gather + one pallas_call + reshape)
# ----------------------------------------------------------------------------
@functools.partial(jax.jit, static_argnums=(3,))
def _enc_forward_jit(bits, perm, consts, num_layers):
    bs, L = bits.shape
    mh_t = consts[-2]
    U = mh_t.shape[0]
    K = consts[0].shape[1] // 2                              # layer-0: K*2*C_in, C_in=1

    # interleaver as an O(L) gather (2x-1 commutes with the permutation, so
    # the bipolar map is done in-kernel on the already-interleaved bits).
    u = jnp.stack([bits, bits[:, perm]], axis=1)             # (bs, 2, L)

    kernel = _make_encoder_kernel(bs, L, K, U, num_layers)

    in_specs = [pl.BlockSpec((1, 2, L), lambda i: (i, 0, 0))]
    in_specs += [pl.BlockSpec(c.shape, lambda i, nd=c.ndim: (0,) * nd)
                 for c in consts]

    out = pl.pallas_call(
        kernel,
        grid=(bs,),
        in_specs=in_specs,
        out_specs=pl.BlockSpec((U, bs, L), lambda i: (0, 0, 0)),
        out_shape=jax.ShapeDtypeStruct((U, bs, L), jnp.float32),
        scratch_shapes=[pltpu.VMEM((U, bs, L), jnp.float32)],
        compiler_params=pltpu.CompilerParams(
            dimension_semantics=("arbitrary",)),
    )(u, *consts)

    # (U, bs, L) slab -> torch layout (bs, U, L, 1); squeeze(dim=2) is a no-op
    # for block_len > 1, matching the reference.
    return jnp.transpose(out, (1, 0, 2))[..., None]


def enc_cnn_turbo_2d_forward(bits, params, perm, cfg, matmul_dtype=jnp.bfloat16):
    """ENC_CNNTurbo_2D.forward (eval mode). bits: (bs, block_len) in {0,1}.
       matmul_dtype=jnp.float32 gives bit-exact f32 parity; bf16 keeps f32
       accumulation (preferred_element_type) and f32 elementwise math."""
    bs, L = bits.shape
    U = cfg.enc_num_unit
    assert U == 2, "literal nn.Linear(enc_num_unit,1)-over-W semantics needs enc_num_unit == 2"

    consts = []
    for (w, b) in params["conv"]:
        wt, bv = _conv_weight_to_matmul_t(w, b, matmul_dtype)
        consts += [wt, bv]
    mh_t, bh_t = _linear_to_matmul_t(params["w_lin"], params["b_lin"], U, matmul_dtype)
    consts += [mh_t, bh_t]

    return _enc_forward_jit(jnp.asarray(bits, jnp.float32),
                            jnp.asarray(perm, jnp.int32),
                            tuple(consts), cfg.enc_num_layer)


# ----------------------------------------------------------------------------
# Deterministic parameter init (torch-layout shapes from the module __init__)
# ----------------------------------------------------------------------------
def init_params(cfg, key):
    U = cfg.enc_num_unit
    K = cfg.enc_kernel_size
    NL = cfg.enc_num_layer
    keys = iter(jax.random.split(key, 2 * NL + 2))

    def nrm(shape, scale=0.3):
        return scale * jax.random.normal(next(keys), shape, jnp.float32)

    conv = []
    for l in range(NL):
        c_in = 1 if l == 0 else U
        conv.append((nrm((U, c_in, K, 3)), nrm((U,))))       # Conv2d (C_out, C_in, K, 3), bias
    w_lin, b_lin = nrm((1, U)), nrm((1,))                    # nn.Linear(enc_num_unit, 1)
    return {"conv": conv, "w_lin": w_lin, "b_lin": b_lin}


# ----------------------------------------------------------------------------
if __name__ == "__main__":
    cfg = Config()
    key = jax.random.PRNGKey(0)
    k_par, k_in, k_perm = jax.random.split(key, 3)

    params = init_params(cfg, k_par)
    perm = jax.random.permutation(k_perm, cfg.block_len)     # interleaver permutation
    bits = jax.random.bernoulli(k_in, 0.5, (2, cfg.block_len)).astype(jnp.float32)

    codes = enc_cnn_turbo_2d_forward(bits, params, perm, cfg)
    codes = jax.block_until_ready(codes)
    assert codes.shape == (2, cfg.enc_num_unit, cfg.block_len, 1)
    assert bool(jnp.all(jnp.isfinite(codes)))
    print("KERNEL_OK")
</pallas_src>

<mosaic_0001>
module attributes {stable_mosaic.version = 11 : i64} {
  func.func @kernel(%arg0: i32, %arg1: memref<1x2x16xf32, #tpu.memory_space<vmem>>, %arg2: memref<4x10xbf16, #tpu.memory_space<vmem>>, %arg3: memref<4x1xf32, #tpu.memory_space<vmem>>, %arg4: memref<4x20xbf16, #tpu.memory_space<vmem>>, %arg5: memref<4x1xf32, #tpu.memory_space<vmem>>, %arg6: memref<2x4xbf16, #tpu.memory_space<vmem>>, %arg7: memref<2x1xf32, #tpu.memory_space<vmem>>, %arg8: memref<2x2x16xf32, #tpu.memory_space<vmem>>, %arg9: memref<2x2x16xf32, #tpu.memory_space<vmem>>) attributes {dimension_semantics = [#tpu.dimension_semantics<arbitrary>], iteration_bounds = array<i64: 2>, scalar_prefetch = 0 : i64, scratch_operands = 1 : i64, tpu.core_type = #tpu.core_type<tc>, window_params = [{transform_indices = @transform_0, window_bounds = array<i64: 1, 2, 16>}, {pipeline_mode = #tpu.pipeline_mode<synchronous>, transform_indices = @transform_1, window_bounds = array<i64: 4, 10>}, {pipeline_mode = #tpu.pipeline_mode<synchronous>, transform_indices = @transform_2, window_bounds = array<i64: 4, 1>}, {pipeline_mode = #tpu.pipeline_mode<synchronous>, transform_indices = @transform_3, window_bounds = array<i64: 4, 20>}, {pipeline_mode = #tpu.pipeline_mode<synchronous>, transform_indices = @transform_4, window_bounds = array<i64: 4, 1>}, {pipeline_mode = #tpu.pipeline_mode<synchronous>, transform_indices = @transform_5, window_bounds = array<i64: 2, 4>}, {pipeline_mode = #tpu.pipeline_mode<synchronous>, transform_indices = @transform_6, window_bounds = array<i64: 2, 1>}, {pipeline_mode = #tpu.pipeline_mode<synchronous>, transform_indices = @transform_7, window_bounds = array<i64: 2, 2, 16>}]} {
    %c0 = arith.constant 0 : index
    %c0_0 = arith.constant 0 : index
    %c0_1 = arith.constant 0 : index
    %0 = vector.load %arg1[%c0, %c0_0, %c0_1] : memref<1x2x16xf32, #tpu.memory_space<vmem>>, vector<1x2x16xf32>
    %1 = vector.shape_cast %0 : vector<1x2x16xf32> to vector<2x16xf32>
    %cst = arith.constant 2.000000e+00 : f32
    %2 = vector.broadcast %cst : f32 to vector<2x16xf32>
    %3 = arith.mulf %2, %1 : vector<2x16xf32>
    %cst_2 = arith.constant 1.000000e+00 : f32
    %4 = vector.broadcast %cst_2 : f32 to vector<2x16xf32>
    %5 = arith.subf %3, %4 : vector<2x16xf32>
    %6 = arith.truncf %5 : vector<2x16xf32> to vector<2x16xbf16>
    %7 = vector.extract_strided_slice %6 {offsets = [0, 14], sizes = [2, 2], strides = [1, 1]} : vector<2x16xbf16> to vector<2x2xbf16>
    %8 = vector.extract_strided_slice %6 {offsets = [0, 0], sizes = [2, 2], strides = [1, 1]} : vector<2x16xbf16> to vector<2x2xbf16>
    %9 = tpu.concatenate %7, %6, %8 in 1 : vector<2x2xbf16>, vector<2x16xbf16>, vector<2x2xbf16> -> vector<2x20xbf16>
    %10 = vector.extract_strided_slice %9 {offsets = [0, 0], sizes = [2, 16], strides = [1, 1]} : vector<2x20xbf16> to vector<2x16xbf16>
    %11 = vector.extract_strided_slice %9 {offsets = [0, 1], sizes = [2, 16], strides = [1, 1]} : vector<2x20xbf16> to vector<2x16xbf16>
    %12 = vector.extract_strided_slice %9 {offsets = [0, 2], sizes = [2, 16], strides = [1, 1]} : vector<2x20xbf16> to vector<2x16xbf16>
    %13 = vector.extract_strided_slice %9 {offsets = [0, 3], sizes = [2, 16], strides = [1, 1]} : vector<2x20xbf16> to vector<2x16xbf16>
    %14 = vector.extract_strided_slice %9 {offsets = [0, 4], sizes = [2, 16], strides = [1, 1]} : vector<2x20xbf16> to vector<2x16xbf16>
    %15 = tpu.concatenate %10, %11, %12, %13, %14 in 0 : vector<2x16xbf16>, vector<2x16xbf16>, vector<2x16xbf16>, vector<2x16xbf16>, vector<2x16xbf16> -> vector<10x16xbf16>
    %c0_3 = arith.constant 0 : index
    %c0_4 = arith.constant 0 : index
    %16 = vector.load %arg2[%c0_3, %c0_4] : memref<4x10xbf16, #tpu.memory_space<vmem>>, vector<4x10xbf16>
    %cst_5 = arith.constant dense<0.000000e+00> : vector<4x16xf32>
    %17 = tpu.matmul %16, %15, %cst_5 {dimension_numbers = #tpu.dot_dimension_numbers<[1], [0], [0], [1], [0, 0, 1, 1], [], []>} : vector<4x10xbf16>, vector<10x16xbf16>, vector<4x16xf32> -> vector<4x16xf32>
    %c0_6 = arith.constant 0 : index
    %c0_7 = arith.constant 0 : index
    %18 = vector.load %arg3[%c0_6, %c0_7] : memref<4x1xf32, #tpu.memory_space<vmem>>, vector<4x1xf32>
    %19 = vector.broadcast %18 : vector<4x1xf32> to vector<4x16xf32>
    %20 = arith.addf %17, %19 : vector<4x16xf32>
    %cst_8 = arith.constant 0.000000e+00 : f32
    %21 = vector.broadcast %cst_8 : f32 to vector<4x16xf32>
    %22 = arith.cmpf ogt, %20, %21 : vector<4x16xf32>
    %cst_9 = arith.constant 0.000000e+00 : f32
    %23 = vector.broadcast %cst_9 : f32 to vector<4x16xf32>
    %24 = arith.minimumf %20, %23 : vector<4x16xf32>
    %25 = math.exp %24 : vector<4x16xf32>
    %cst_10 = arith.constant 1.000000e+00 : f32
    %26 = vector.broadcast %cst_10 : f32 to vector<4x16xf32>
    %27 = arith.subf %25, %26 : vector<4x16xf32>
    %28 = arith.select %22, %20, %27 : vector<4x16xi1>, vector<4x16xf32>
    %29 = arith.truncf %28 : vector<4x16xf32> to vector<4x16xbf16>
    %30 = vector.extract_strided_slice %29 {offsets = [0, 14], sizes = [4, 2], strides = [1, 1]} : vector<4x16xbf16> to vector<4x2xbf16>
    %31 = vector.extract_strided_slice %29 {offsets = [0, 0], sizes = [4, 2], strides = [1, 1]} : vector<4x16xbf16> to vector<4x2xbf16>
    %32 = tpu.concatenate %30, %29, %31 in 1 : vector<4x2xbf16>, vector<4x16xbf16>, vector<4x2xbf16> -> vector<4x20xbf16>
    %33 = vector.extract_strided_slice %32 {offsets = [0, 0], sizes = [4, 16], strides = [1, 1]} : vector<4x20xbf16> to vector<4x16xbf16>
    %34 = vector.extract_strided_slice %32 {offsets = [0, 1], sizes = [4, 16], strides = [1, 1]} : vector<4x20xbf16> to vector<4x16xbf16>
    %35 = vector.extract_strided_slice %32 {offsets = [0, 2], sizes = [4, 16], strides = [1, 1]} : vector<4x20xbf16> to vector<4x16xbf16>
    %36 = vector.extract_strided_slice %32 {offsets = [0, 3], sizes = [4, 16], strides = [1, 1]} : vector<4x20xbf16> to vector<4x16xbf16>
    %37 = vector.extract_strided_slice %32 {offsets = [0, 4], sizes = [4, 16], strides = [1, 1]} : vector<4x20xbf16> to vector<4x16xbf16>
    %38 = tpu.concatenate %33, %34, %35, %36, %37 in 0 : vector<4x16xbf16>, vector<4x16xbf16>, vector<4x16xbf16>, vector<4x16xbf16>, vector<4x16xbf16> -> vector<20x16xbf16>
    %c0_11 = arith.constant 0 : index
    %c0_12 = arith.constant 0 : index
    %39 = vector.load %arg4[%c0_11, %c0_12] : memref<4x20xbf16, #tpu.memory_space<vmem>>, vector<4x20xbf16>
    %cst_13 = arith.constant dense<0.000000e+00> : vector<4x16xf32>
    %40 = tpu.matmul %39, %38, %cst_13 {dimension_numbers = #tpu.dot_dimension_numbers<[1], [0], [0], [1], [0, 0, 1, 1], [], []>} : vector<4x20xbf16>, vector<20x16xbf16>, vector<4x16xf32> -> vector<4x16xf32>
    %c0_14 = arith.constant 0 : index
    %c0_15 = arith.constant 0 : index
    %41 = vector.load %arg5[%c0_14, %c0_15] : memref<4x1xf32, #tpu.memory_space<vmem>>, vector<4x1xf32>
    %42 = vector.broadcast %41 : vector<4x1xf32> to vector<4x16xf32>
    %43 = arith.addf %40, %42 : vector<4x16xf32>
    %cst_16 = arith.constant 0.000000e+00 : f32
    %44 = vector.broadcast %cst_16 : f32 to vector<4x16xf32>
    %45 = arith.cmpf ogt, %43, %44 : vector<4x16xf32>
    %cst_17 = arith.constant 0.000000e+00 : f32
    %46 = vector.broadcast %cst_17 : f32 to vector<4x16xf32>
    %47 = arith.minimumf %43, %46 : vector<4x16xf32>
    %48 = math.exp %47 : vector<4x16xf32>
    %cst_18 = arith.constant 1.000000e+00 : f32
    %49 = vector.broadcast %cst_18 : f32 to vector<4x16xf32>
    %50 = arith.subf %48, %49 : vector<4x16xf32>
    %51 = arith.select %45, %43, %50 : vector<4x16xi1>, vector<4x16xf32>
    %c0_19 = arith.constant 0 : index
    %c0_20 = arith.constant 0 : index
    %52 = vector.load %arg6[%c0_19, %c0_20] : memref<2x4xbf16, #tpu.memory_space<vmem>>, vector<2x4xbf16>
    %53 = arith.truncf %51 : vector<4x16xf32> to vector<4x16xbf16>
    %cst_21 = arith.constant dense<0.000000e+00> : vector<2x16xf32>
    %54 = tpu.matmul %52, %53, %cst_21 {dimension_numbers = #tpu.dot_dimension_numbers<[1], [0], [0], [1], [0, 0, 1, 1], [], []>} : vector<2x4xbf16>, vector<4x16xbf16>, vector<2x16xf32> -> vector<2x16xf32>
    %c0_22 = arith.constant 0 : index
    %c0_23 = arith.constant 0 : index
    %55 = vector.load %arg7[%c0_22, %c0_23] : memref<2x1xf32, #tpu.memory_space<vmem>>, vector<2x1xf32>
    %56 = vector.broadcast %55 : vector<2x1xf32> to vector<2x16xf32>
    %57 = arith.addf %54, %56 : vector<2x16xf32>
    %cst_24 = arith.constant 0.000000e+00 : f32
    %58 = vector.broadcast %cst_24 : f32 to vector<2x16xf32>
    %59 = arith.cmpf ogt, %57, %58 : vector<2x16xf32>
    %cst_25 = arith.constant 0.000000e+00 : f32
    %60 = vector.broadcast %cst_25 : f32 to vector<2x16xf32>
    %61 = arith.minimumf %57, %60 : vector<2x16xf32>
    %62 = math.exp %61 : vector<2x16xf32>
    %cst_26 = arith.constant 1.000000e+00 : f32
    %63 = vector.broadcast %cst_26 : f32 to vector<2x16xf32>
    %64 = arith.subf %62, %63 : vector<2x16xf32>
    %65 = arith.select %59, %57, %64 : vector<2x16xi1>, vector<2x16xf32>
    %66 = vector.shape_cast %65 : vector<2x16xf32> to vector<2x1x16xf32>
    %c0_27 = arith.constant 0 : index
    %67 = arith.index_cast %arg0 : i32 to index
    %c0_28 = arith.constant 0 : index
    %68 = vector.load %arg9[%c0_27, %67, %c0_28] : memref<2x2x16xf32, #tpu.memory_space<vmem>>, vector<2x1x16xf32>
    tpu.vector_store %arg9[%c0_27, %67, %c0_28], %66 {strides = array<i32>} : memref<2x2x16xf32, #tpu.memory_space<vmem>>, vector<2x1x16xf32>,
    %c1_i32 = arith.constant 1 : i32
    %69 = arith.cmpi eq, %arg0, %c1_i32 : i32
    %70 = arith.extui %69 : i1 to i32
    %c0_i32 = arith.constant 0 : i32
    %71 = arith.cmpi ne, %70, %c0_i32 : i32
    scf.if %71 {
      %c0_29 = arith.constant 0 : index
      %c0_30 = arith.constant 0 : index
      %c0_31 = arith.constant 0 : index
      %72 = vector.load %arg9[%c0_29, %c0_30, %c0_31] : memref<2x2x16xf32, #tpu.memory_space<vmem>>, vector<2x2x16xf32>
      %73 = vector.shape_cast %72 : vector<2x2x16xf32> to vector<1x2x2x16xf32>
      %cst_32 = arith.constant dense<0.000000e+00> : vector<1xf32>
      %74 = vector.multi_reduction <add>, %73, %cst_32 [1, 2, 3] : vector<1x2x2x16xf32> to vector<1xf32>
      %75 = vector.shape_cast %74 : vector<1xf32> to vector<1x1x1x1xf32>
      %76 = vector.extract %75[0, 0, 0, 0] : f32 from vector<1x1x1x1xf32>
      %77 = arith.mulf %72, %72 : vector<2x2x16xf32>
      %78 = vector.shape_cast %77 : vector<2x2x16xf32> to vector<1x2x2x16xf32>
      %cst_33 = arith.constant dense<0.000000e+00> : vector<1xf32>
      %79 = vector.multi_reduction <add>, %78, %cst_33 [1, 2, 3] : vector<1x2x2x16xf32> to vector<1xf32>
      %80 = vector.shape_cast %79 : vector<1xf32> to vector<1x1x1x1xf32>
      %81 = vector.extract %80[0, 0, 0, 0] : f32 from vector<1x1x1x1xf32>
      %cst_34 = arith.constant 6.400000e+01 : f32
      %82 = arith.divf %76, %cst_34 : f32
      %cst_35 = arith.constant 6.400000e+01 : f32
      %83 = arith.mulf %cst_35, %82 : f32
      %84 = arith.mulf %83, %82 : f32
      %85 = arith.subf %81, %84 : f32
      %cst_36 = arith.constant 6.300000e+01 : f32
      %86 = arith.divf %85, %cst_36 : f32
      %87 = vector.broadcast %82 : f32 to vector<2x2x16xf32>
      %88 = arith.subf %72, %87 : vector<2x2x16xf32>
      %89 = math.rsqrt %86 : f32
      %90 = vector.broadcast %89 : f32 to vector<2x2x16xf32>
      %91 = arith.mulf %88, %90 : vector<2x2x16xf32>
      %c0_37 = arith.constant 0 : index
      %c0_38 = arith.constant 0 : index
      %c0_39 = arith.constant 0 : index
      %92 = vector.load %arg8[%c0_37, %c0_38, %c0_39] : memref<2x2x16xf32, #tpu.memory_space<vmem>>, vector<2x2x16xf32>
      tpu.vector_store %arg8[%c0_37, %c0_38, %c0_39], %91 {strides = array<i32>} : memref<2x2x16xf32, #tpu.memory_space<vmem>>, vector<2x2x16xf32>,
    } else {
    }
    return
  }
  func.func @transform_0(%arg0: i32) -> (i32, i32, i32) {
    %c0_i32 = arith.constant 0 : i32
    %c0_i32_0 = arith.constant 0 : i32
    %c0_i32_1 = arith.constant 0 : i32
    return %arg0, %c0_i32, %c0_i32_0 : i32, i32, i32
  }
  func.func @transform_1(%arg0: i32) -> (i32, i32) {
    %c0_i32 = arith.constant 0 : i32
    %c0_i32_0 = arith.constant 0 : i32
    %c0_i32_1 = arith.constant 0 : i32
    return %c0_i32, %c0_i32_0 : i32, i32
  }
  func.func @transform_2(%arg0: i32) -> (i32, i32) {
    %c0_i32 = arith.constant 0 : i32
    %c0_i32_0 = arith.constant 0 : i32
    %c0_i32_1 = arith.constant 0 : i32
    return %c0_i32, %c0_i32_0 : i32, i32
  }
  func.func @transform_3(%arg0: i32) -> (i32, i32) {
    %c0_i32 = arith.constant 0 : i32
    %c0_i32_0 = arith.constant 0 : i32
    %c0_i32_1 = arith.constant 0 : i32
    return %c0_i32, %c0_i32_0 : i32, i32
  }
  func.func @transform_4(%arg0: i32) -> (i32, i32) {
    %c0_i32 = arith.constant 0 : i32
    %c0_i32_0 = arith.constant 0 : i32
    %c0_i32_1 = arith.constant 0 : i32
    return %c0_i32, %c0_i32_0 : i32, i32
  }
  func.func @transform_5(%arg0: i32) -> (i32, i32) {
    %c0_i32 = arith.constant 0 : i32
    %c0_i32_0 = arith.constant 0 : i32
    %c0_i32_1 = arith.constant 0 : i32
    return %c0_i32, %c0_i32_0 : i32, i32
  }
  func.func @transform_6(%arg0: i32) -> (i32, i32) {
    %c0_i32 = arith.constant 0 : i32
    %c0_i32_0 = arith.constant 0 : i32
    %c0_i32_1 = arith.constant 0 : i32
    return %c0_i32, %c0_i32_0 : i32, i32
  }
  func.func @transform_7(%arg0: i32) -> (i32, i32, i32) {
    %c0_i32 = arith.constant 0 : i32
    %c0_i32_0 = arith.constant 0 : i32
    %c0_i32_1 = arith.constant 0 : i32
    %c0_i32_2 = arith.constant 0 : i32
    return %c0_i32, %c0_i32_0, %c0_i32_1 : i32, i32, i32
  }
}

</mosaic_0001>

<llo_original>
// kernel: _enc_forward_jit.1
$region0: #{_enc_forward_jit.1}
  #allocation0 [shape = 'u32[]', space=smem, size = 0x4, offset = 0x4, fixed_abs, tag = 'smem constant byte address 0x4 - core index']
  #allocation1 [shape = 'u32[144,128]{1,0:T(1,128)}', space=vmem, size = 0x12000, scoped, tag = 'internal scratch']
  #allocation2 [shape = 'f32[2,2,16]{2,1,0:T(2,128)}', space=vmem, size = 0x800, scoped, tag = 'scratch operand']
  %s0 = inlined_call_operand.vmem [shape: f32[2,2,16], index: 0, kind: input, shape index: {}]
  %s1 = inlined_call_operand.vmem [shape: bf16[4,10], index: 1, kind: input, shape index: {}]
  %s2 = inlined_call_operand.vmem [shape: f32[4,1], index: 2, kind: input, shape index: {}]
  %s3 = inlined_call_operand.vmem [shape: bf16[4,20], index: 3, kind: input, shape index: {}]
  %s4 = inlined_call_operand.vmem [shape: f32[4,1], index: 4, kind: input, shape index: {}]
  %s5 = inlined_call_operand.vmem [shape: bf16[2,4], index: 5, kind: input, shape index: {}]
  %s6 = inlined_call_operand.vmem [shape: f32[2,1], index: 6, kind: input, shape index: {}]
  %s7 = inlined_call_operand.vmem [shape: f32[2,2,16], index: 7, kind: output, shape index: {}]
  %s8 = sld [smem:[#allocation0]]
  $region65: #{_enc_forward_jit.1} parent=0
    _
  %s10 = ssub.s32 1, %s8
  %s11 = scalar_select 0, %s10, %s8
  loop: start=0, step=1, limit=4
  $region2: #{_enc_forward_jit.1} parent=0 // loop_pre_header
    _
  $region3: #{_enc_forward_jit.1} parent=0 // loop_header
    %s13 = sphi 0, %s17
    %p14 = scmp.ge.s32.totalorder %s13, 4
    %s23 = sphi 0, %s25
    %s26 = sphi 0, %s23
    %s27 = sphi 0, %s26
    %s43 = sphi 0, %s27
    %s47 = sphi 0, %s47
    %s49 = sphi 0, %s47
    %s50 = sphi 0, %s49
    %s64 = sphi 0, %s50
    %s68 = sphi 0, %s68
    %s70 = sphi 0, %s68
    %s71 = sphi 0, %s70
    %s85 = sphi 0, %s71
    %s89 = sphi 0, %s89
    %s91 = sphi 0, %s89
    %s92 = sphi 0, %s91
    %s106 = sphi 0, %s92
    %s110 = sphi 0, %s110
    %s112 = sphi 0, %s110
    %s113 = sphi 0, %s112
    %s127 = sphi 0, %s113
    %s131 = sphi 0, %s131
    %s133 = sphi 0, %s131
    %s134 = sphi 0, %s133
    %s148 = sphi 0, %s134
    %s152 = sphi 0, %s152
    %s154 = sphi 0, %s152
    %s155 = sphi 0, %s154
    %s169 = sphi 0, %s155
    %s173 = sphi 0, %s173
    %s175 = sphi 0, %s173
    %s176 = sphi 0, %s175
    %s190 = sphi 0, %s176
  $region4: #{_enc_forward_jit.1} parent=0 // loop_header_branch
    %16 = sbr.rel (%p14) target = $region8
  $region5: #{_enc_forward_jit.1} parent=0 // loop_body
    %s18 = ssub.s32 %s13, 1
    %s19 = ssub.s32 %s13, 2
    %s20 = sadd.s32 %s13, 1
    %s21 = ssub.s32 %s13, %s20
    %p22 = scmp.eq.s32.totalorder %s21, 0
    %s24 = sadd.s32 %s23, 1
    %s25 = scalar_select %p22, %s23, %s24
    %p28 = pneg %p22
    %p29 = scmp.eq.s32.totalorder %s13, 1
    %p30 = por %p28, %p29
    %p31 = scmp.ne.s32.totalorder %s23, %s26
    %p32 = scmp.eq.s32.totalorder %s13, 0
    %p33 = por %p31, %p32
    %p34 = scmp.ne.s32.totalorder %s23, %s26
    %p35 = scmp.eq.s32.totalorder %s18, 1
    %p36 = por %p34, %p35
    %p37 = scmp.ne.s32.totalorder %s26, %s27
    %p38 = scmp.eq.s32.totalorder %s18, 0
    %p39 = por %p37, %p38
    %p40 = scmp.ne.s32.totalorder %s26, %s27
    %p41 = scmp.eq.s32.totalorder %s19, 1
    %p42 = por %p40, %p41
    %p44 = scmp.ne.s32.totalorder %s27, %s43
    %p45 = scmp.eq.s32.totalorder %s19, 0
    %p46 = por %p44, %p45
    %s48 = sadd.s32 %s47, 1
    %p51 = scmp.eq.s32.totalorder %s13, 1
    %p52 = scmp.ne.s32.totalorder %s47, %s49
    %p53 = scmp.eq.s32.totalorder %s13, 0
    %p54 = por %p52, %p53
    %p55 = scmp.ne.s32.totalorder %s47, %s49
    %p56 = scmp.eq.s32.totalorder %s18, 1
    %p57 = por %p55, %p56
    %p58 = scmp.ne.s32.totalorder %s49, %s50
    %p59 = scmp.eq.s32.totalorder %s18, 0
    %p60 = por %p58, %p59
    %p61 = scmp.ne.s32.totalorder %s49, %s50
    %p62 = scmp.eq.s32.totalorder %s19, 1
    %p63 = por %p61, %p62
    %p65 = scmp.ne.s32.totalorder %s50, %s64
    %p66 = scmp.eq.s32.totalorder %s19, 0
    %p67 = por %p65, %p66
    %s69 = sadd.s32 %s68, 1
    %p72 = scmp.eq.s32.totalorder %s13, 1
    %p73 = scmp.ne.s32.totalorder %s68, %s70
    %p74 = scmp.eq.s32.totalorder %s13, 0
    %p75 = por %p73, %p74
    %p76 = scmp.ne.s32.totalorder %s68, %s70
    %p77 = scmp.eq.s32.totalorder %s18, 1
    %p78 = por %p76, %p77
    %p79 = scmp.ne.s32.totalorder %s70, %s71
    %p80 = scmp.eq.s32.totalorder %s18, 0
    %p81 = por %p79, %p80
    %p82 = scmp.ne.s32.totalorder %s70, %s71
    %p83 = scmp.eq.s32.totalorder %s19, 1
    %p84 = por %p82, %p83
    %p86 = scmp.ne.s32.totalorder %s71, %s85
    %p87 = scmp.eq.s32.totalorder %s19, 0
    %p88 = por %p86, %p87
    %s90 = sadd.s32 %s89, 1
    %p93 = scmp.eq.s32.totalorder %s13, 1
    %p94 = scmp.ne.s32.totalorder %s89, %s91
    %p95 = scmp.eq.s32.totalorder %s13, 0
    %p96 = por %p94, %p95
    %p97 = scmp.ne.s32.totalorder %s89, %s91
    %p98 = scmp.eq.s32.totalorder %s18, 1
    %p99 = por %p97, %p98
    %p100 = scmp.ne.s32.totalorder %s91, %s92
    %p101 = scmp.eq.s32.totalorder %s18, 0
    %p102 = por %p100, %p101
    %p103 = scmp.ne.s32.totalorder %s91, %s92
    %p104 = scmp.eq.s32.totalorder %s19, 1
    %p105 = por %p103, %p104
    %p107 = scmp.ne.s32.totalorder %s92, %s106
    %p108 = scmp.eq.s32.totalorder %s19, 0
    %p109 = por %p107, %p108
    %s111 = sadd.s32 %s110, 1
    %p114 = scmp.eq.s32.totalorder %s13, 1
    %p115 = scmp.ne.s32.totalorder %s110, %s112
    %p116 = scmp.eq.s32.totalorder %s13, 0
    %p117 = por %p115, %p116
    %p118 = scmp.ne.s32.totalorder %s110, %s112
    %p119 = scmp.eq.s32.totalorder %s18, 1
    %p120 = por %p118, %p119
    %p121 = scmp.ne.s32.totalorder %s112, %s113
    %p122 = scmp.eq.s32.totalorder %s18, 0
    %p123 = por %p121, %p122
    %p124 = scmp.ne.s32.totalorder %s112, %s113
    %p125 = scmp.eq.s32.totalorder %s19, 1
    %p126 = por %p124, %p125
    %p128 = scmp.ne.s32.totalorder %s113, %s127
    %p129 = scmp.eq.s32.totalorder %s19, 0
    %p130 = por %p128, %p129
    %s132 = sadd.s32 %s131, 1
    %p135 = scmp.eq.s32.totalorder %s13, 1
    %p136 = scmp.ne.s32.totalorder %s131, %s133
    %p137 = scmp.eq.s32.totalorder %s13, 0
    %p138 = por %p136, %p137
    %p139 = scmp.ne.s32.totalorder %s131, %s133
    %p140 = scmp.eq.s32.totalorder %s18, 1
    %p141 = por %p139, %p140
    %p142 = scmp.ne.s32.totalorder %s133, %s134
    %p143 = scmp.eq.s32.totalorder %s18, 0
    %p144 = por %p142, %p143
    %p145 = scmp.ne.s32.totalorder %s133, %s134
    %p146 = scmp.eq.s32.totalorder %s19, 1
    %p147 = por %p145, %p146
    %p149 = scmp.ne.s32.totalorder %s134, %s148
    %p150 = scmp.eq.s32.totalorder %s19, 0
    %p151 = por %p149, %p150
    %s153 = sadd.s32 %s152, 1
    %p156 = scmp.eq.s32.totalorder %s13, 1
    %p157 = scmp.ne.s32.totalorder %s152, %s154
    %p158 = scmp.eq.s32.totalorder %s13, 0
    %p159 = por %p157, %p158
    %p160 = scmp.ne.s32.totalorder %s152, %s154
    %p161 = scmp.eq.s32.totalorder %s18, 1
    %p162 = por %p160, %p161
    %p163 = scmp.ne.s32.totalorder %s154, %s155
    %p164 = scmp.eq.s32.totalorder %s18, 0
    %p165 = por %p163, %p164
    %p166 = scmp.ne.s32.totalorder %s154, %s155
    %p167 = scmp.eq.s32.totalorder %s19, 1
    %p168 = por %p166, %p167
    %p170 = scmp.ne.s32.totalorder %s155, %s169
    %p171 = scmp.eq.s32.totalorder %s19, 0
    %p172 = por %p170, %p171
    %s174 = sadd.s32 %s173, 1
    %p177 = scmp.eq.s32.totalorder %s13, 1
    %p178 = scmp.ne.s32.totalorder %s173, %s175
    %p179 = scmp.eq.s32.totalorder %s13, 0
    %p180 = por %p178, %p179
    %p181 = scmp.ne.s32.totalorder %s173, %s175
    %p182 = scmp.eq.s32.totalorder %s18, 1
    %p183 = por %p181, %p182
    %p184 = scmp.ne.s32.totalorder %s175, %s176
    %p185 = scmp.eq.s32.totalorder %s18, 0
    %p186 = por %p184, %p185
    %p187 = scmp.ne.s32.totalorder %s175, %s176
    %p188 = scmp.eq.s32.totalorder %s19, 1
    %p189 = por %p187, %p188
    %p191 = scmp.ne.s32.totalorder %s176, %s190
    %p192 = scmp.eq.s32.totalorder %s19, 0
    %p193 = por %p191, %p192
    %p194 = scmp.le.s32.totalorder 1, %s13
    %p195 = scmp.lt.s32.totalorder %s13, 3
    %p196 = pnand %p194, %p195
    %p197 = pneg %p196
    // Predicated region
    $region9: #{_enc_forward_jit.1} parent=5 // pred_check
      _
    $region10: #{_enc_forward_jit.1} parent=5 // pred_check_branch
      %199 = sbr.rel (%p196) target = $region12
    $region11: #{_enc_forward_jit.1} parent=5 // pred_region
      %s200 = ssub.s32 %s13, 1
      // Predicated region
      $region13: #{_enc_forward_jit.1} parent=11 // pred_check
        %p201 = pneg %p60
      $region14: #{_enc_forward_jit.1} parent=11 // pred_check_branch
        %203 = sbr.rel (%p201) target = $region16
      $region15: #{_enc_forward_jit.1} parent=11 // pred_region
        _
      $region16: #{_enc_forward_jit.1} parent=11 // pred_fallthru
        _
      // Predicated region
      $region17: #{_enc_forward_jit.1} parent=11 // pred_check
        %p204 = pneg %p81
      $region18: #{_enc_forward_jit.1} parent=11 // pred_check_branch
        %206 = sbr.rel (%p204) target = $region20
      $region19: #{_enc_forward_jit.1} parent=11 // pred_region
        _
      $region20: #{_enc_forward_jit.1} parent=11 // pred_fallthru
        _
      // Predicated region
      $region21: #{_enc_forward_jit.1} parent=11 // pred_check
        %p207 = pneg %p102
      $region22: #{_enc_forward_jit.1} parent=11 // pred_check_branch
        %209 = sbr.rel (%p207) target = $region24
      $region23: #{_enc_forward_jit.1} parent=11 // pred_region
        _
      $region24: #{_enc_forward_jit.1} parent=11 // pred_fallthru
        _
      // Predicated region
      $region25: #{_enc_forward_jit.1} parent=11 // pred_check
        %p210 = pneg %p123
      $region26: #{_enc_forward_jit.1} parent=11 // pred_check_branch
        %212 = sbr.rel (%p210) target = $region28
      $region27: #{_enc_forward_jit.1} parent=11 // pred_region
        _
      $region28: #{_enc_forward_jit.1} parent=11 // pred_fallthru
        _
      // Predicated region
      $region29: #{_enc_forward_jit.1} parent=11 // pred_check
        %p213 = pneg %p144
      $region30: #{_enc_forward_jit.1} parent=11 // pred_check_branch
        %215 = sbr.rel (%p213) target = $region32
      $region31: #{_enc_forward_jit.1} parent=11 // pred_region
        _
      $region32: #{_enc_forward_jit.1} parent=11 // pred_fallthru
        _
      // Predicated region
      $region33: #{_enc_forward_jit.1} parent=11 // pred_check
        %p216 = pneg %p165
      $region34: #{_enc_forward_jit.1} parent=11 // pred_check_branch
        %218 = sbr.rel (%p216) target = $region36
      $region35: #{_enc_forward_jit.1} parent=11 // pred_region
        _
      $region36: #{_enc_forward_jit.1} parent=11 // pred_fallthru
        _
    $region12: #{_enc_forward_jit.1} parent=5 // pred_fallthru
      _
    %p219 = scmp.lt.s32.totalorder %s13, 2
    // Predicated region
    $region37: #{_enc_forward_jit.1} parent=5 // pred_check
      %p220 = pneg %p219
    $region38: #{_enc_forward_jit.1} parent=5 // pred_check_branch
      %222 = sbr.rel (%p220) target = $region40
    $region39: #{_enc_forward_jit.1} parent=5 // pred_region
      // Predicated region
      $region41: #{_enc_forward_jit.1} parent=39 // pred_check
        %p223 = pneg %p33
      $region42: #{_enc_forward_jit.1} parent=39 // pred_check_branch
        %225 = sbr.rel (%p223) target = $region44
      $region43: #{_enc_forward_jit.1} parent=39 // pred_region
        %p226 = scmp.lt.s32.totalorder %s13, 1
        %s227 = scalar_select %p226, %s13, 1
        %s228 = smul.addr %s227, 2
        %s229 = scalar_lea.vmem %s0, %s228
      $region44: #{_enc_forward_jit.1} parent=39 // pred_fallthru
        _
    $region40: #{_enc_forward_jit.1} parent=5 // pred_fallthru
      _
    %p230 = scmp.le.s32.totalorder 1, %s13
    %p231 = scmp.lt.s32.totalorder %s13, 3
    %p232 = pnand %p230, %p231
    %p233 = pneg %p232
    // Predicated region
    $region45: #{_enc_forward_jit.1} parent=5 // pred_check
      _
    $region46: #{_enc_forward_jit.1} parent=5 // pred_check_branch
      %235 = sbr.rel (%p232) target = $region48
    $region47: #{_enc_forward_jit.1} parent=5 // pred_region
      %s236 = ssub.s32 %s13, 1
      %p237 = scmp.lt.s32.totalorder %s18, 1
      %s238 = scalar_select %p237, %s18, 1
      %s239 = smul.addr %s238, 2
      %s240 = scalar_lea.vmem %s0, %s239
      %p241 = pneg %p39
      %p242 = pneg %p36
      %p243 = pneg %p60
      %p244 = pneg %p57
      %p245 = pneg %p81
      %p246 = pneg %p78
      %p247 = pneg %p102
      %p248 = pneg %p99
      %p249 = pneg %p123
      %p250 = pneg %p120
      %p251 = pneg %p144
      %p252 = pneg %p141
      %p253 = pneg %p165
      %p254 = pneg %p162
      %p255 = pneg %p186
      %p256 = pneg %p183
      %p257 = scmp.lt.s32.totalorder %s18, 1
      %s258 = scalar_select %p257, %s18, 1
      %s259 = smul.addr %s258, 2
      %s260 = scalar_lea.vmem %s0, %s259
      %v262 = vld [vmem:[%s260] sm:$0x3]
      %v263 = vmul.f32 %v262, 2.0
      %v264 = vsub.f32 %v263, 1.0
      %v265 = vpack.c.bf16 %v264, %v264
      %267 = vrot.lane.b32.xlu0 %v265, 114
      %v268 = vpop.permute.xlu0 %267
      %269 = vrot.lane.b32.xlu0 %v265, 2
      %v270 = vpop.permute.xlu0 %269
      %271 = vrot.lane.b32.xlu0 %v265, 18
      %v272 = vpop.permute.xlu0 %271
      %vm273 = vcmask 15360
      %v276 = vsel %vm273, %v268, %v270
      %vm277 = vcmask 146432
      %v279 = vsel %vm277, %v276, %v272
      %v281 = vrot.slane %v279, 7
      %282 = vrot.lane.b32.xlu0 %v281, 127
      %v283 = vpop.permute.xlu0 %282
      %v284 = vrot.slane %v279, 6
      %285 = vrot.lane.b32.xlu0 %v284, 126
      %v286 = vpop.permute.xlu0 %285
      %v287 = vrot.slane %v279, 5
      %288 = vrot.lane.b32.xlu0 %v287, 125
      %v289 = vpop.permute.xlu0 %288
      %v290 = vrot.slane %v279, 4
      %291 = vrot.lane.b32.xlu0 %v290, 124
      %v292 = vpop.permute.xlu0 %291
      %vm293 = vcmask 1040384
      %v295 = vsel %vm293, %v279, %v283
      %vm296 = vcmask 1041408
      %v298 = vsel %vm296, %v295, %v286
      %vm299 = vcmask 1042432
      %v301 = vsel %vm299, %v298, %v289
      %vm302 = vcmask 1043456
      %v304 = vsel %vm302, %v301, %v292
      %v305 = vld [vmem:[%s1] sm:$0x3]
      %v306 = vld [vmem:[%s2] sm:$0xf]
      %308 = vset.pattern.permute.xlu0 0
      %309 = vperm.xlu0 %308, %v306
      %v310 = vpop.permute.xlu0 %309
      %vm312 = vcmask 80896
      %v314 = vsel %vm312, %v305, 0
      %vm316 = vcmask 1044480
      %v317 = vsel %vm316, %v304, 0
      %319 = vmatprep.subr.bf16.mxu0 0
      %320 = vmatpush1.bf16.msra.mxu0 %v317
      %321 = vmatprep.subr.bf16.mxu0 0
      %322 = vmatpush1.bf16.msra.mxu0 0
      %323 = vmatprep.subr.bf16.mxu0 0
      %324 = vmatpush1.bf16.msra.mxu0 0
      %325 = vmatprep.subr.bf16.mxu0 0
      %326 = vmatpush1.bf16.msra.mxu0 0
      %327 = vmatprep.subr.bf16.mxu0 0
      %328 = vmatpush1.bf16.msra.mxu0 0
      %329 = vmatprep.subr.bf16.mxu0 0
      %330 = vmatpush1.bf16.msra.mxu0 0
      %331 = vmatprep.subr.bf16.mxu0 0
      %332 = vmatpush1.bf16.msra.mxu0 0
      %333 = vmatprep.subr.bf16.mxu0 0
      %334 = vmatpush1.bf16.msra.mxu0 0
      %335 = vmatprep.subr.bf16.mxu0 0
      %336 = vmatpush1.bf16.msra.mxu0 0
      %337 = vmatprep.subr.bf16.mxu0 0
      %338 = vmatpush1.bf16.msra.mxu0 0
      %339 = vmatprep.subr.bf16.mxu0 0
      %340 = vmatpush1.bf16.msra.mxu0 0
      %341 = vmatprep.subr.bf16.mxu0 0
      %342 = vmatpush1.bf16.msra.mxu0 0
      %343 = vmatprep.subr.bf16.mxu0 0
      %344 = vmatpush1.bf16.msra.mxu0 0
      %345 = vmatprep.subr.bf16.mxu0 0
      %346 = vmatpush1.bf16.msra.mxu0 0
      %347 = vmatprep.subr.bf16.mxu0 0
      %348 = vmatpush1.bf16.msra.mxu0 0
      %349 = vmatprep.subr.bf16.mxu0 0
      %350 = vmatpush1.bf16.msra.mxu0 0
      %351 = vmatprep.mubr.bf16.mxu0 0
      %352 = vmatmul.mubr.bf16.gmra.mrb[0].mxu0 %v314
      %v353 = vpop.f32.mrb[0].mxu0
      %v354 = vadd.f32 %v310, %v353
      %v355 = vpop.f32.mrb[0].mxu0
      %v356 = vpop.f32.mrb[0].mxu0
      %v357 = vpop.f32.mrb[0].mxu0
      %358 = vdwg.mxu0
      %vm359 = vcmp.gt.f32.partialorder %v354, 0.0
      %v360 = vmin.f32 %v354, 0.0
      %v361 = vmul.f32 %v360, 1.442695
      %v362 = vpow.pop %v361
      %v363 = vsub.f32 %v362, 1.0
      %v364 = vsel %vm359, %v354, %v363
      %v365 = vpack.c.bf16 %v364, %v364
      %367 = vrot.lane.b32.xlu0 %v365, 114
      %v368 = vpop.permute.xlu0 %367
      %369 = vrot.lane.b32.xlu0 %v365, 2
      %v370 = vpop.permute.xlu0 %369
      %371 = vrot.lane.b32.xlu0 %v365, 18
      %v372 = vpop.permute.xlu0 %371
      %v375 = vsel %vm273, %v368, %v370
      %v377 = vsel %vm277, %v375, %v372
      %v379 = vrot.slane %v377, 6
      %380 = vrot.lane.b32.xlu0 %v379, 127
      %v381 = vpop.permute.xlu0 %380
      %v382 = vrot.slane %v377, 4
      %383 = vrot.lane.b32.xlu0 %v382, 126
      %v384 = vpop.permute.xlu0 %383
      %v385 = vrot.slane %v377, 2
      %386 = vrot.lane.b32.xlu0 %v385, 125
      %v387 = vpop.permute.xlu0 %386
      %388 = vrot.lane.b32.xlu0 %v377, 124
      %v389 = vpop.permute.xlu0 %388
      %v391 = vsel %vm296, %v377, %v381
      %v393 = vsel %vm302, %v391, %v384
      %vm394 = vcmask 1045504
      %v396 = vsel %vm394, %v393, %v387
      %v398 = vld [vmem:[%s3] sm:$0x3]
      %v399 = vld [vmem:[%s4] sm:$0xf]
      %401 = vset.pattern.permute.xlu0 0
      %402 = vperm.xlu0 %401, %v399
      %v403 = vpop.permute.xlu0 %402
      %vm405 = vcmask 162816
      %v407 = vsel %vm405, %v398, 0
      %v410 = vsel %vm296, %v389, 0
      %412 = vmatprep.subr.bf16.mxu0 0
      %413 = vmatpush1.bf16.msra.mxu0 %v396
      %414 = vmatprep.subr.bf16.mxu0 0
      %415 = vmatpush1.bf16.msra.mxu0 %v410
      %416 = vmatprep.subr.bf16.mxu0 0
      %417 = vmatpush1.bf16.msra.mxu0 0
      %418 = vmatprep.subr.bf16.mxu0 0
      %419 = vmatpush1.bf16.msra.mxu0 0
      %420 = vmatprep.subr.bf16.mxu0 0
      %421 = vmatpush1.bf16.msra.mxu0 0
      %422 = vmatprep.subr.bf16.mxu0 0
      %423 = vmatpush1.bf16.msra.mxu0 0
      %424 = vmatprep.subr.bf16.mxu0 0
      %425 = vmatpush1.bf16.msra.mxu0 0
      %426 = vmatprep.subr.bf16.mxu0 0
      %427 = vmatpush1.bf16.msra.mxu0 0
      %428 = vmatprep.subr.bf16.mxu0 0
      %429 = vmatpush1.bf16.msra.mxu0 0
      %430 = vmatprep.subr.bf16.mxu0 0
      %431 = vmatpush1.bf16.msra.mxu0 0
      %432 = vmatprep.subr.bf16.mxu0 0
      %433 = vmatpush1.bf16.msra.mxu0 0
      %434 = vmatprep.subr.bf16.mxu0 0
      %435 = vmatpush1.bf16.msra.mxu0 0
      %436 = vmatprep.subr.bf16.mxu0 0
      %437 = vmatpush1.bf16.msra.mxu0 0
      %438 = vmatprep.subr.bf16.mxu0 0
      %439 = vmatpush1.bf16.msra.mxu0 0
      %440 = vmatprep.subr.bf16.mxu0 0
      %441 = vmatpush1.bf16.msra.mxu0 0
      %442 = vmatprep.subr.bf16.mxu0 0
      %443 = vmatpush1.bf16.msra.mxu0 0
      %444 = vmatprep.mubr.bf16.mxu0 0
      %445 = vmatmul.mubr.bf16.gmra.mrb[0].mxu0 %v407
      %v446 = vpop.f32.mrb[0].mxu0
      %v447 = vadd.f32 %v403, %v446
      %v448 = vpop.f32.mrb[0].mxu0
      %v449 = vpop.f32.mrb[0].mxu0
      %v450 = vpop.f32.mrb[0].mxu0
      %451 = vdwg.mxu0
      %vm452 = vcmp.gt.f32.partialorder %v447, 0.0
      %v453 = vmin.f32 %v447, 0.0
      %v454 = vmul.f32 %v453, 1.442695
      %v455 = vpow.pop %v454
      %v456 = vsub.f32 %v455, 1.0
      %v457 = vsel %vm452, %v447, %v456
      %v458 = vld [vmem:[%s5] sm:$0x1]
      %v459 = vpack.c.bf16 %v457, %v457
      %v460 = vld [vmem:[%s6] sm:$0x3]
      %462 = vset.pattern.permute.xlu0 0
      %463 = vperm.xlu0 %462, %v460
      %v464 = vpop.permute.xlu0 %463
      %vm466 = vcmask 31744
      %v468 = vsel %vm466, %v458, 0
      %v471 = vsel %vm296, %v459, 0
      %473 = vmatprep.subr.bf16.mxu0 0
      %474 = vmatpush1.bf16.msra.mxu0 %v471
      %475 = vmatprep.subr.bf16.mxu0 0
      %476 = vmatpush1.bf16.msra.mxu0 0
      %477 = vmatprep.subr.bf16.mxu0 0
      %478 = vmatpush1.bf16.msra.mxu0 0
      %479 = vmatprep.subr.bf16.mxu0 0
      %480 = vmatpush1.bf16.msra.mxu0 0
      %481 = vmatprep.subr.bf16.mxu0 0
      %482 = vmatpush1.bf16.msra.mxu0 0
      %483 = vmatprep.subr.bf16.mxu0 0
      %484 = vmatpush1.bf16.msra.mxu0 0
      %485 = vmatprep.subr.bf16.mxu0 0
      %486 = vmatpush1.bf16.msra.mxu0 0
      %487 = vmatprep.subr.bf16.mxu0 0
      %488 = vmatpush1.bf16.msra.mxu0 0
      %489 = vmatprep.subr.bf16.mxu0 0
      %490 = vmatpush1.bf16.msra.mxu0 0
      %491 = vmatprep.subr.bf16.mxu0 0
      %492 = vmatpush1.bf16.msra.mxu0 0
      %493 = vmatprep.subr.bf16.mxu0 0
      %494 = vmatpush1.bf16.msra.mxu0 0
      %495 = vmatprep.subr.bf16.mxu0 0
      %496 = vmatpush1.bf16.msra.mxu0 0
      %497 = vmatprep.subr.bf16.mxu0 0
      %498 = vmatpush1.bf16.msra.mxu0 0
      %499 = vmatprep.subr.bf16.mxu0 0
      %500 = vmatpush1.bf16.msra.mxu0 0
      %501 = vmatprep.subr.bf16.mxu0 0
      %502 = vmatpush1.bf16.msra.mxu0 0
      %503 = vmatprep.subr.bf16.mxu0 0
      %504 = vmatpush1.bf16.msra.mxu0 0
      %505 = vmatprep.mubr.bf16.mxu0 0
      %506 = vmatmul.mubr.bf16.gmra.mrb[0].mxu0 %v468
      %v507 = vpop.f32.mrb[0].mxu0
      %v508 = vadd.f32 %v464, %v507
      %v509 = vpop.f32.mrb[0].mxu0
      %v510 = vpop.f32.mrb[0].mxu0
      %v511 = vpop.f32.mrb[0].mxu0
      %512 = vdwg.mxu0
      %vm513 = vcmp.gt.f32.partialorder %v508, 0.0
      %v514 = vmin.f32 %v508, 0.0
      %v515 = vmul.f32 %v514, 1.442695
      %v516 = vpow.pop %v515
      %v517 = vsub.f32 %v516, 1.0
      %v518 = vsel %vm513, %v508, %v517
      %v521 = vunpack.c.l.s4 1966171168
      %v522 = vunpack.c.0.s8 %v521
      %v523 = vlaneseq
      %v524 = vshrl.u32 %v523, 7
      %v525 = vsub.s32 %v522, %v524
      %v526 = vrot.slane %v518, %v525
      %v527 = vcombine.high %v526, %v526
      %v529 = vunpack.c.l.s4 1966171168
      %v530 = vunpack.c.0.s8 %v529
      %v531 = vlaneseq
      %v532 = vshrl.u32 %v531, 7
      %v533 = vsub.s32 %v530, %v532
      %v534 = vrot.slane %v526, %v533
      %v536 = vunpack.c.l.s4 1966171168
      %v537 = vunpack.c.0.s8 %v536
      %v538 = vlaneseq
      %v539 = vshrl.u32 %v538, 7
      %v540 = vsub.s32 %v537, %v539
      %v541 = vrot.slane %v527, %v540
      %s544 = scalar_lea.vmem [#allocation2], %s18
      %vm545 = vcmask 122880
      %546 = vst.msk [vmem:[%s544] sm:$0x1] %vm545, %v534
      %547 = vst.msk [vmem:[%s544 + $0x2] sm:$0x1] %vm545, %v541
      %p548 = scmp.eq.s32.totalorder %s18, 1
      // Predicated region
      $region49: #{_enc_forward_jit.1} parent=47 // pred_check
        %p549 = pneg %p548
      $region50: #{_enc_forward_jit.1} parent=47 // pred_check_branch
        %551 = sbr.rel (%p549) target = $region52
      $region51: #{_enc_forward_jit.1} parent=47 // pred_region
        %v552 = vld [vmem:[#allocation2] sm:$0x3]
        %v553 = vld [vmem:[#allocation2 + $0x2] sm:$0x3]
        %vm554 = vcmask 123904
        %v555 = vsel %vm554, %v552, 0.0
        %v556 = vsel %vm554, %v553, 0.0
        %v557 = vadd.f32 %v555, %v556
        %558 = vadd.xlane.f32.xlu0 %v557
        %v559 = vpop.xlane.xlu0 %558
        %v560 = vrot.slane %v559, 4
        %v561 = vadd.f32 %v559, %v560
        %v562 = vrot.slane %v561, 2
        %v563 = vadd.f32 %v561, %v562
        %v564 = vrot.slane %v563, 1
        %v565 = vadd.f32 %v563, %v564
        %s566 = vtos %v565
        %v567 = vmul.f32 %v552, %v552
        %v568 = vmul.f32 %v553, %v553
        %v569 = vsel %vm554, %v567, 0.0
        %v570 = vsel %vm554, %v568, 0.0
        %v571 = vadd.f32 %v569, %v570
        %572 = vadd.xlane.f32.xlu0 %v571
        %v573 = vpop.xlane.xlu0 %572
        %v574 = vrot.slane %v573, 4
        %v575 = vadd.f32 %v573, %v574
        %v576 = vrot.slane %v575, 2
        %v577 = vadd.f32 %v575, %v576
        %v578 = vrot.slane %v577, 1
        %v579 = vadd.f32 %v577, %v578
        %s580 = vtos %v579
        %v581 = vrcp.pop 64.0
        %s582 = vtos %v581
        %s583 = smul.f32 %s566, %s582
        %s584 = smul.f32 %s583, 64.0
        %s585 = smul.f32 %s584, %s583
        %s586 = ssub.f32 %s580, %s585
        %v587 = vrcp.pop 63.0
        %s588 = vtos %v587
        %s589 = smul.f32 %s586, %s588
        %v590 = vstv %s583
        %v591 = vsub.f32 %v552, %v590
        %v592 = vsub.f32 %v553, %v590
        %v593 = vstv %s589
        %v594 = vrsqrt.pop %v593
        %s595 = vtos %v594
        %v596 = vstv %s595
        %v597 = vmul.f32 %v591, %v596
        %v598 = vmul.f32 %v592, %v596
        %599 = vst.msk [vmem:[%s7] sm:$0x3] %vm554, %v597
        %600 = vst.msk [vmem:[%s7 + $0x2] sm:$0x3] %vm554, %v598
      $region52: #{_enc_forward_jit.1} parent=47 // pred_fallthru
        _
      // Predicated region
      $region53: #{_enc_forward_jit.1} parent=47 // pred_check
        %p601 = pneg %p183
      $region54: #{_enc_forward_jit.1} parent=47 // pred_check_branch
        %603 = sbr.rel (%p601) target = $region56
      $region55: #{_enc_forward_jit.1} parent=47 // pred_region
        _
      $region56: #{_enc_forward_jit.1} parent=47 // pred_fallthru
        _
      // Predicated region
      $region57: #{_enc_forward_jit.1} parent=47 // pred_check
        %p604 = pneg %p183
      $region58: #{_enc_forward_jit.1} parent=47 // pred_check_branch
        %606 = sbr.rel (%p604) target = $region60
      $region59: #{_enc_forward_jit.1} parent=47 // pred_region
        _
      $region60: #{_enc_forward_jit.1} parent=47 // pred_fallthru
        _
    $region48: #{_enc_forward_jit.1} parent=5 // pred_fallthru
      _
    %p607 = scmp.le.s32.totalorder 2, %s13
    // Predicated region
    $region61: #{_enc_forward_jit.1} parent=5 // pred_check
      %p608 = pneg %p607
    $region62: #{_enc_forward_jit.1} parent=5 // pred_check_branch
      %610 = sbr.rel (%p608) target = $region64
    $region63: #{_enc_forward_jit.1} parent=5 // pred_region
      %s611 = ssub.s32 %s13, 2
    $region64: #{_enc_forward_jit.1} parent=5 // pred_fallthru
      _
  $region6: #{_enc_forward_jit.1} parent=0 // loop_footer
    %s17 = sadd.s32 1, %s13
  $region7: #{_enc_forward_jit.1} parent=0 // loop_footer_branch
    %12 = sbr.rel target = $region3
  $region8: #{_enc_forward_jit.1} parent=0 // loop_exit
    _

</llo_original>
